<compile_context>
chip_gen: v7x
topology: tpu7x:2x2x1
jax: 0.10.0
libtpu: 0.0.40
codegen_flags: <defaults>
</compile_context>

<pallas_src>
import math
import jax
import jax.numpy as jnp
from jax.experimental import pallas as pl
from jax.experimental.pallas import tpu as pltpu

DEC_SLAB_WIDTH = 128  # lane-dense decoder output slab (one full f32 vreg row)


def _vmem():
    return pl.BlockSpec(memory_space=pltpu.MemorySpace.VMEM)


# -----------------------------------------------------------------------------
# Fused GCNMK forward kernel
# -----------------------------------------------------------------------------
def gcnmk_kernel(idx_ref,                      # VMEM (E, 2) int32
                 x_ref, adji_ref, adjd_ref,    # VMEM inputs
                 w1cat_ref, b1ix_ref, b1dx_ref,
                 wi2_ref, wd2_ref, b2_ref,
                 wdec1_ref, bdec1_ref, wdec2_ref, bdec2_ref, wdec3_ref, bdec3_ref,
                 x2_ref, dec_ref):             # VMEM outputs
    f32 = jnp.float32
    h1 = wi2_ref.shape[0]          # nhid1
    nd2 = wdec2_ref.shape[1]
    e = idx_ref.shape[0]
    n = x_ref.shape[0]

    adj_i = adji_ref[...]
    adj_d = adjd_ref[...]

    # ---- layer 1: batched projection (one lane-dense MXU matmul) -------------
    # s = x @ [W_i1 | W_i1d | W_d1i | W_d1]   -> (N, 4*h1)
    s = jnp.dot(x_ref[...], w1cat_ref[...], preferred_element_type=f32)
    # only two adjacency matmuls:
    #   ti = adj_i @ [x@W_i1  | x@W_i1d]      -> (N, 2*h1)
    #   td = adj_d @ [x@W_d1i | x@W_d1 ]      -> (N, 2*h1)
    ti = jnp.dot(adj_i, s[:, :2 * h1], preferred_element_type=f32)
    td = jnp.dot(adj_d, s[:, 2 * h1:], preferred_element_type=f32)
    # i_x = relu(i_gc1(x, adj_i) + d_gc1_i(x, adj_d))
    i_x = jnp.maximum(ti[:, :h1] + td[:, :h1] + b1ix_ref[...], 0.0)
    # d_x = relu(d_gc1(x, adj_d) + i_gc1_d(x, adj_i))
    d_x = jnp.maximum(ti[:, h1:] + td[:, h1:] + b1dx_ref[...], 0.0)

    # ---- layer 2: x2 = relu(i_gc2(i_x, adj_i) + d_gc2(d_x, adj_d)) -----------
    si = jnp.dot(i_x, wi2_ref[...], preferred_element_type=f32)
    sd = jnp.dot(d_x, wd2_ref[...], preferred_element_type=f32)
    x2 = jnp.maximum(jnp.dot(adj_i, si, preferred_element_type=f32)
                     + jnp.dot(adj_d, sd, preferred_element_type=f32)
                     + b2_ref[...], 0.0)
    x2_ref[...] = x2

    # ---- pair gather + concat via one-hot MXU gather (no scalar loop) --------
    col = jax.lax.broadcasted_iota(jnp.int32, (e, n), 1)
    sel0 = (col == idx_ref[:, 0:1]).astype(f32)          # (E, N)
    sel1 = (col == idx_ref[:, 1:2]).astype(f32)          # (E, N)
    feat = jnp.concatenate(
        [jnp.dot(sel0, x2, preferred_element_type=f32),   # x2[idx[0]]
         jnp.dot(sel1, x2, preferred_element_type=f32)],  # x2[idx[1]]
        axis=1)                                           # (E, 2*h2)

    # ---- decoder MLP: relu -> relu -> sigmoid --------------------------------
    d1 = jnp.maximum(jnp.dot(feat, wdec1_ref[...], preferred_element_type=f32)
                     + bdec1_ref[...], 0.0)
    oo = jnp.maximum(jnp.dot(d1, wdec2_ref[...], preferred_element_type=f32)
                     + bdec2_ref[...], 0.0)
    # decoder3 has output width 1: lane reduction instead of a width-1 matmul
    # (wdec3 passed pre-transposed as (1, nd2)).
    logits = jnp.sum(oo * wdec3_ref[...], axis=1, keepdims=True) + bdec3_ref[...]
    o = jax.nn.sigmoid(logits)                                    # (E, 1)

    # lane-dense output slab: cols [0:nd2] = oo, cols [nd2:] = broadcast(o)
    pad_w = dec_ref.shape[1] - nd2
    dec_ref[...] = jnp.concatenate([oo, jnp.broadcast_to(o, (e, pad_w))], axis=1)


# -----------------------------------------------------------------------------
# Wrapper: single pallas_call, slices the packed decoder slab
# -----------------------------------------------------------------------------
def gcnmk_forward(fp, x, i_adj, d_adj, idx):
    n = x.shape[0]
    nhid2 = fp['w_i2'].shape[1]
    nd2 = fp['wd2'].shape[1]
    e = idx.shape[1]

    idx_t = idx.T.astype(jnp.int32)            # (E, 2) for in-kernel one-hot

    x2, dec = pl.pallas_call(
        gcnmk_kernel,
        out_shape=(jax.ShapeDtypeStruct((n, nhid2), jnp.float32),
                   jax.ShapeDtypeStruct((e, DEC_SLAB_WIDTH), jnp.float32)),
        in_specs=[_vmem()] * 16,
        out_specs=(_vmem(), _vmem()),
    )(idx_t, x, i_adj, d_adj,
      fp['w1_cat'], fp['b1_ix'], fp['b1_dx'],
      fp['w_i2'], fp['w_d2'], fp['b2'],
      fp['wd1'], fp['bd1'], fp['wd2'], fp['bd2'], fp['wd3t'], fp['bd3'])

    oo = dec[:, :nd2]
    o = dec[:, nd2:nd2 + 1]
    return o, x2, oo


# -----------------------------------------------------------------------------
# Parameter initialization (deterministic, mimics reset_parameters uniform init)
# -----------------------------------------------------------------------------
def init_params(key, nfeat, nhid1, nhid2, nd1, nd2):
    keys = jax.random.split(key, 18)

    def gc(k1, k2, fin, fout):
        stdv = 1.0 / math.sqrt(fout)           # GraphConvolution: 1/sqrt(out_features)
        w = jax.random.uniform(k1, (fin, fout), jnp.float32, -stdv, stdv)
        b = jax.random.uniform(k2, (1, fout), jnp.float32, -stdv, stdv)
        return w, b

    def lin(k1, k2, fin, fout):
        stdv = 1.0 / math.sqrt(fin)            # nn.Linear-style bound
        w = jax.random.uniform(k1, (fin, fout), jnp.float32, -stdv, stdv)
        b = jax.random.uniform(k2, (1, fout), jnp.float32, -stdv, stdv)
        return w, b

    p = {}
    p['i_gc1'] = gc(keys[0], keys[1], nfeat, nhid1)
    p['i_gc2'] = gc(keys[2], keys[3], nhid1, nhid2)
    p['i_gc1_d'] = gc(keys[4], keys[5], nfeat, nhid1)
    p['d_gc1'] = gc(keys[6], keys[7], nfeat, nhid1)
    p['d_gc2'] = gc(keys[8], keys[9], nhid1, nhid2)
    p['d_gc1_i'] = gc(keys[10], keys[11], nfeat, nhid1)
    p['decoder1'] = lin(keys[12], keys[13], nhid2 * 2, nd1)
    p['decoder2'] = lin(keys[14], keys[15], nd1, nd2)
    p['decoder3'] = lin(keys[16], keys[17], nd2, 1)
    return p


def fuse_params(p):
    """Pack params for the fused kernel (done once, outside the kernel)."""
    (w_i1, b_i1), (w_id, b_id) = p['i_gc1'], p['i_gc1_d']
    (w_d1, b_d1), (w_di, b_di) = p['d_gc1'], p['d_gc1_i']
    # [for adj_i: W_i1 | W_i1d]  [for adj_d: W_d1i | W_d1]
    w1_cat = jnp.concatenate([w_i1, w_id, w_di, w_d1], axis=1)
    b1_ix = b_i1 + b_di                       # i_x bias:  b_i1 + b_d1i
    b1_dx = b_d1 + b_id                       # d_x bias:  b_d1 + b_i1d
    (w_i2, b_i2), (w_d2, b_d2) = p['i_gc2'], p['d_gc2']
    b2 = b_i2 + b_d2
    (wd1, bd1), (wd2, bd2), (wd3, bd3) = (p['decoder1'], p['decoder2'],
                                          p['decoder3'])
    return dict(w1_cat=w1_cat, b1_ix=b1_ix, b1_dx=b1_dx,
                w_i2=w_i2, w_d2=w_d2, b2=b2,
                wd1=wd1, bd1=bd1, wd2=wd2, bd2=bd2,
                wd3t=wd3.T, bd3=bd3)


# -----------------------------------------------------------------------------
# Pure-JAX reference (mirrors the PyTorch module, eval mode)
# -----------------------------------------------------------------------------
def gcnmk_reference(p, x, i_adj, d_adj, idx):
    def gc(pp, inp, adj):
        w, b = pp
        return adj @ (inp @ w) + b

    i_x = jax.nn.relu(gc(p['i_gc1'], x, i_adj) + gc(p['d_gc1_i'], x, d_adj))
    d_x = jax.nn.relu(gc(p['d_gc1'], x, d_adj) + gc(p['i_gc1_d'], x, i_adj))
    x2 = jax.nn.relu(gc(p['i_gc2'], i_x, i_adj) + gc(p['d_gc2'], d_x, d_adj))
    feat = jnp.concatenate([x2[idx[0]], x2[idx[1]]], axis=1)
    w1, b1 = p['decoder1']
    w2, b2 = p['decoder2']
    w3, b3 = p['decoder3']
    o1 = jax.nn.relu(feat @ w1 + b1)
    oo = jax.nn.relu(o1 @ w2 + b2)
    o = jax.nn.sigmoid(oo @ w3 + b3)
    return o, x2, oo


if __name__ == "__main__":
    N = 16          # number of graph nodes
    NFEAT = 8
    NHID1 = 32
    NHID2 = 16
    ND1 = 32
    ND2 = 16
    E = 8           # number of node pairs in idx

    key = jax.random.PRNGKey(0)
    k_param, k_x, k_ia, k_da, k_idx = jax.random.split(key, 5)

    params = init_params(k_param, NFEAT, NHID1, NHID2, ND1, ND2)
    fused = fuse_params(params)

    x = jax.random.normal(k_x, (N, NFEAT), dtype=jnp.float32)
    # Dense row-normalized adjacency matrices.
    i_adj = jax.random.uniform(k_ia, (N, N), dtype=jnp.float32)
    i_adj = i_adj / jnp.sum(i_adj, axis=1, keepdims=True)
    d_adj = jax.random.uniform(k_da, (N, N), dtype=jnp.float32)
    d_adj = d_adj / jnp.sum(d_adj, axis=1, keepdims=True)
    idx = jax.random.randint(k_idx, (2, E), 0, N, dtype=jnp.int32)

    fwd = jax.jit(gcnmk_forward)
    o, x_out, oo = fwd(fused, x, i_adj, d_adj, idx)
    jax.block_until_ready((o, x_out, oo))

    assert o.shape == (E, 1)
    assert x_out.shape == (N, NHID2)
    assert oo.shape == (E, ND2)
    assert bool(jnp.all(jnp.isfinite(o)))
    assert bool(jnp.all(jnp.isfinite(x_out)))
    assert bool(jnp.all(jnp.isfinite(oo)))

    # correctness vs. pure-JAX reference
    o_r, x_r, oo_r = gcnmk_reference(params, x, i_adj, d_adj, idx)
    assert float(jnp.max(jnp.abs(o - o_r))) < 5e-3
    assert float(jnp.max(jnp.abs(x_out - x_r))) < 5e-3
    assert float(jnp.max(jnp.abs(oo - oo_r))) < 5e-3

    print("KERNEL_OK")
</pallas_src>

<mosaic_0001>
module attributes {stable_mosaic.version = 11 : i64} {
  func.func @gcnmk_kernel(%arg0: memref<8x2xi32, #tpu.memory_space<vmem>>, %arg1: memref<16x8xf32, #tpu.memory_space<vmem>>, %arg2: memref<16x16xf32, #tpu.memory_space<vmem>>, %arg3: memref<16x16xf32, #tpu.memory_space<vmem>>, %arg4: memref<8x128xf32, #tpu.memory_space<vmem>>, %arg5: memref<1x32xf32, #tpu.memory_space<vmem>>, %arg6: memref<1x32xf32, #tpu.memory_space<vmem>>, %arg7: memref<32x16xf32, #tpu.memory_space<vmem>>, %arg8: memref<32x16xf32, #tpu.memory_space<vmem>>, %arg9: memref<1x16xf32, #tpu.memory_space<vmem>>, %arg10: memref<32x32xf32, #tpu.memory_space<vmem>>, %arg11: memref<1x32xf32, #tpu.memory_space<vmem>>, %arg12: memref<32x16xf32, #tpu.memory_space<vmem>>, %arg13: memref<1x16xf32, #tpu.memory_space<vmem>>, %arg14: memref<1x16xf32, #tpu.memory_space<vmem>>, %arg15: memref<1x1xf32, #tpu.memory_space<vmem>>, %arg16: memref<16x16xf32, #tpu.memory_space<vmem>>, %arg17: memref<8x128xf32, #tpu.memory_space<vmem>>) attributes {dimension_semantics = [], scalar_prefetch = 0 : i64, scratch_operands = 0 : i64, tpu.core_type = #tpu.core_type<tc>} {
    %c0 = arith.constant 0 : index
    %c0_0 = arith.constant 0 : index
    %0 = vector.load %arg2[%c0, %c0_0] : memref<16x16xf32, #tpu.memory_space<vmem>>, vector<16x16xf32>
    %c0_1 = arith.constant 0 : index
    %c0_2 = arith.constant 0 : index
    %1 = vector.load %arg3[%c0_1, %c0_2] : memref<16x16xf32, #tpu.memory_space<vmem>>, vector<16x16xf32>
    %c0_3 = arith.constant 0 : index
    %c0_4 = arith.constant 0 : index
    %2 = vector.load %arg1[%c0_3, %c0_4] : memref<16x8xf32, #tpu.memory_space<vmem>>, vector<16x8xf32>
    %c0_5 = arith.constant 0 : index
    %c0_6 = arith.constant 0 : index
    %3 = vector.load %arg4[%c0_5, %c0_6] : memref<8x128xf32, #tpu.memory_space<vmem>>, vector<8x128xf32>
    %cst = arith.constant dense<0.000000e+00> : vector<16x128xf32>
    %4 = tpu.matmul %2, %3, %cst {dimension_numbers = #tpu.dot_dimension_numbers<[1], [0], [0], [1], [0, 0, 1, 1], [], []>} : vector<16x8xf32>, vector<8x128xf32>, vector<16x128xf32> -> vector<16x128xf32>
    %5 = vector.extract_strided_slice %4 {offsets = [0, 0], sizes = [16, 64], strides = [1, 1]} : vector<16x128xf32> to vector<16x64xf32>
    %cst_7 = arith.constant dense<0.000000e+00> : vector<16x64xf32>
    %6 = tpu.matmul %0, %5, %cst_7 {dimension_numbers = #tpu.dot_dimension_numbers<[1], [0], [0], [1], [0, 0, 1, 1], [], []>} : vector<16x16xf32>, vector<16x64xf32>, vector<16x64xf32> -> vector<16x64xf32>
    %7 = vector.extract_strided_slice %4 {offsets = [0, 64], sizes = [16, 64], strides = [1, 1]} : vector<16x128xf32> to vector<16x64xf32>
    %cst_8 = arith.constant dense<0.000000e+00> : vector<16x64xf32>
    %8 = tpu.matmul %1, %7, %cst_8 {dimension_numbers = #tpu.dot_dimension_numbers<[1], [0], [0], [1], [0, 0, 1, 1], [], []>} : vector<16x16xf32>, vector<16x64xf32>, vector<16x64xf32> -> vector<16x64xf32>
    %9 = vector.extract_strided_slice %6 {offsets = [0, 0], sizes = [16, 32], strides = [1, 1]} : vector<16x64xf32> to vector<16x32xf32>
    %10 = vector.extract_strided_slice %8 {offsets = [0, 0], sizes = [16, 32], strides = [1, 1]} : vector<16x64xf32> to vector<16x32xf32>
    %11 = arith.addf %9, %10 : vector<16x32xf32>
    %c0_9 = arith.constant 0 : index
    %c0_10 = arith.constant 0 : index
    %12 = vector.load %arg5[%c0_9, %c0_10] : memref<1x32xf32, #tpu.memory_space<vmem>>, vector<1x32xf32>
    %13 = vector.broadcast %12 : vector<1x32xf32> to vector<16x32xf32>
    %14 = arith.addf %11, %13 : vector<16x32xf32>
    %cst_11 = arith.constant 0.000000e+00 : f32
    %15 = vector.broadcast %cst_11 : f32 to vector<16x32xf32>
    %16 = arith.maximumf %14, %15 : vector<16x32xf32>
    %17 = vector.extract_strided_slice %6 {offsets = [0, 32], sizes = [16, 32], strides = [1, 1]} : vector<16x64xf32> to vector<16x32xf32>
    %18 = vector.extract_strided_slice %8 {offsets = [0, 32], sizes = [16, 32], strides = [1, 1]} : vector<16x64xf32> to vector<16x32xf32>
    %19 = arith.addf %17, %18 : vector<16x32xf32>
    %c0_12 = arith.constant 0 : index
    %c0_13 = arith.constant 0 : index
    %20 = vector.load %arg6[%c0_12, %c0_13] : memref<1x32xf32, #tpu.memory_space<vmem>>, vector<1x32xf32>
    %21 = vector.broadcast %20 : vector<1x32xf32> to vector<16x32xf32>
    %22 = arith.addf %19, %21 : vector<16x32xf32>
    %cst_14 = arith.constant 0.000000e+00 : f32
    %23 = vector.broadcast %cst_14 : f32 to vector<16x32xf32>
    %24 = arith.maximumf %22, %23 : vector<16x32xf32>
    %c0_15 = arith.constant 0 : index
    %c0_16 = arith.constant 0 : index
    %25 = vector.load %arg7[%c0_15, %c0_16] : memref<32x16xf32, #tpu.memory_space<vmem>>, vector<32x16xf32>
    %cst_17 = arith.constant dense<0.000000e+00> : vector<16x16xf32>
    %26 = tpu.matmul %16, %25, %cst_17 {dimension_numbers = #tpu.dot_dimension_numbers<[1], [0], [0], [1], [0, 0, 1, 1], [], []>} : vector<16x32xf32>, vector<32x16xf32>, vector<16x16xf32> -> vector<16x16xf32>
    %c0_18 = arith.constant 0 : index
    %c0_19 = arith.constant 0 : index
    %27 = vector.load %arg8[%c0_18, %c0_19] : memref<32x16xf32, #tpu.memory_space<vmem>>, vector<32x16xf32>
    %cst_20 = arith.constant dense<0.000000e+00> : vector<16x16xf32>
    %28 = tpu.matmul %24, %27, %cst_20 {dimension_numbers = #tpu.dot_dimension_numbers<[1], [0], [0], [1], [0, 0, 1, 1], [], []>} : vector<16x32xf32>, vector<32x16xf32>, vector<16x16xf32> -> vector<16x16xf32>
    %cst_21 = arith.constant dense<0.000000e+00> : vector<16x16xf32>
    %29 = tpu.matmul %0, %26, %cst_21 {dimension_numbers = #tpu.dot_dimension_numbers<[1], [0], [0], [1], [0, 0, 1, 1], [], []>} : vector<16x16xf32>, vector<16x16xf32>, vector<16x16xf32> -> vector<16x16xf32>
    %cst_22 = arith.constant dense<0.000000e+00> : vector<16x16xf32>
    %30 = tpu.matmul %1, %28, %cst_22 {dimension_numbers = #tpu.dot_dimension_numbers<[1], [0], [0], [1], [0, 0, 1, 1], [], []>} : vector<16x16xf32>, vector<16x16xf32>, vector<16x16xf32> -> vector<16x16xf32>
    %31 = arith.addf %29, %30 : vector<16x16xf32>
    %c0_23 = arith.constant 0 : index
    %c0_24 = arith.constant 0 : index
    %32 = vector.load %arg9[%c0_23, %c0_24] : memref<1x16xf32, #tpu.memory_space<vmem>>, vector<1x16xf32>
    %33 = vector.broadcast %32 : vector<1x16xf32> to vector<16x16xf32>
    %34 = arith.addf %31, %33 : vector<16x16xf32>
    %cst_25 = arith.constant 0.000000e+00 : f32
    %35 = vector.broadcast %cst_25 : f32 to vector<16x16xf32>
    %36 = arith.maximumf %34, %35 : vector<16x16xf32>
    %c0_26 = arith.constant 0 : index
    %c0_27 = arith.constant 0 : index
    %37 = vector.load %arg16[%c0_26, %c0_27] : memref<16x16xf32, #tpu.memory_space<vmem>>, vector<16x16xf32>
    tpu.vector_store %arg16[%c0_26, %c0_27], %36 {strides = array<i32>} : memref<16x16xf32, #tpu.memory_space<vmem>>, vector<16x16xf32>,
    %38 = tpu.iota {dimensions = array<i32: 1>} : vector<8x16xi32>
    %c0_28 = arith.constant 0 : index
    %c0_29 = arith.constant 0 : index
    %39 = vector.load %arg0[%c0_28, %c0_29] : memref<8x2xi32, #tpu.memory_space<vmem>>, vector<8x1xi32>
    %40 = vector.broadcast %39 : vector<8x1xi32> to vector<8x16xi32>
    %41 = arith.cmpi eq, %38, %40 : vector<8x16xi32>
    %42 = arith.extui %41 : vector<8x16xi1> to vector<8x16xi32>
    %43 = arith.sitofp %42 : vector<8x16xi32> to vector<8x16xf32>
    %c0_30 = arith.constant 0 : index
    %c1 = arith.constant 1 : index
    %44 = vector.load %arg0[%c0_30, %c1] : memref<8x2xi32, #tpu.memory_space<vmem>>, vector<8x1xi32>
    %45 = vector.broadcast %44 : vector<8x1xi32> to vector<8x16xi32>
    %46 = arith.cmpi eq, %38, %45 : vector<8x16xi32>
    %47 = arith.extui %46 : vector<8x16xi1> to vector<8x16xi32>
    %48 = arith.sitofp %47 : vector<8x16xi32> to vector<8x16xf32>
    %cst_31 = arith.constant dense<0.000000e+00> : vector<8x16xf32>
    %49 = tpu.matmul %43, %36, %cst_31 {dimension_numbers = #tpu.dot_dimension_numbers<[1], [0], [0], [1], [0, 0, 1, 1], [], []>} : vector<8x16xf32>, vector<16x16xf32>, vector<8x16xf32> -> vector<8x16xf32>
    %cst_32 = arith.constant dense<0.000000e+00> : vector<8x16xf32>
    %50 = tpu.matmul %48, %36, %cst_32 {dimension_numbers = #tpu.dot_dimension_numbers<[1], [0], [0], [1], [0, 0, 1, 1], [], []>} : vector<8x16xf32>, vector<16x16xf32>, vector<8x16xf32> -> vector<8x16xf32>
    %51 = tpu.concatenate %49, %50 in 1 : vector<8x16xf32>, vector<8x16xf32> -> vector<8x32xf32>
    %c0_33 = arith.constant 0 : index
    %c0_34 = arith.constant 0 : index
    %52 = vector.load %arg10[%c0_33, %c0_34] : memref<32x32xf32, #tpu.memory_space<vmem>>, vector<32x32xf32>
    %cst_35 = arith.constant dense<0.000000e+00> : vector<8x32xf32>
    %53 = tpu.matmul %51, %52, %cst_35 {dimension_numbers = #tpu.dot_dimension_numbers<[1], [0], [0], [1], [0, 0, 1, 1], [], []>} : vector<8x32xf32>, vector<32x32xf32>, vector<8x32xf32> -> vector<8x32xf32>
    %c0_36 = arith.constant 0 : index
    %c0_37 = arith.constant 0 : index
    %54 = vector.load %arg11[%c0_36, %c0_37] : memref<1x32xf32, #tpu.memory_space<vmem>>, vector<1x32xf32>
    %55 = vector.broadcast %54 : vector<1x32xf32> to vector<8x32xf32>
    %56 = arith.addf %53, %55 : vector<8x32xf32>
    %cst_38 = arith.constant 0.000000e+00 : f32
    %57 = vector.broadcast %cst_38 : f32 to vector<8x32xf32>
    %58 = arith.maximumf %56, %57 : vector<8x32xf32>
    %c0_39 = arith.constant 0 : index
    %c0_40 = arith.constant 0 : index
    %59 = vector.load %arg12[%c0_39, %c0_40] : memref<32x16xf32, #tpu.memory_space<vmem>>, vector<32x16xf32>
    %cst_41 = arith.constant dense<0.000000e+00> : vector<8x16xf32>
    %60 = tpu.matmul %58, %59, %cst_41 {dimension_numbers = #tpu.dot_dimension_numbers<[1], [0], [0], [1], [0, 0, 1, 1], [], []>} : vector<8x32xf32>, vector<32x16xf32>, vector<8x16xf32> -> vector<8x16xf32>
    %c0_42 = arith.constant 0 : index
    %c0_43 = arith.constant 0 : index
    %61 = vector.load %arg13[%c0_42, %c0_43] : memref<1x16xf32, #tpu.memory_space<vmem>>, vector<1x16xf32>
    %62 = vector.broadcast %61 : vector<1x16xf32> to vector<8x16xf32>
    %63 = arith.addf %60, %62 : vector<8x16xf32>
    %cst_44 = arith.constant 0.000000e+00 : f32
    %64 = vector.broadcast %cst_44 : f32 to vector<8x16xf32>
    %65 = arith.maximumf %63, %64 : vector<8x16xf32>
    %c0_45 = arith.constant 0 : index
    %c0_46 = arith.constant 0 : index
    %66 = vector.load %arg14[%c0_45, %c0_46] : memref<1x16xf32, #tpu.memory_space<vmem>>, vector<1x16xf32>
    %67 = vector.broadcast %66 : vector<1x16xf32> to vector<8x16xf32>
    %68 = arith.mulf %65, %67 : vector<8x16xf32>
    %cst_47 = arith.constant dense<0.000000e+00> : vector<8xf32>
    %69 = vector.multi_reduction <add>, %68, %cst_47 [1] : vector<8x16xf32> to vector<8xf32>
    %70 = vector.shape_cast %69 : vector<8xf32> to vector<8x1xf32>
    %c0_48 = arith.constant 0 : index
    %c0_49 = arith.constant 0 : index
    %71 = vector.load %arg15[%c0_48, %c0_49] : memref<1x1xf32, #tpu.memory_space<vmem>>, vector<1x1xf32>
    %72 = vector.broadcast %71 : vector<1x1xf32> to vector<8x1xf32>
    %73 = arith.addf %70, %72 : vector<8x1xf32>
    %74 = arith.negf %73 : vector<8x1xf32>
    %75 = math.exp %74 : vector<8x1xf32>
    %cst_50 = arith.constant 1.000000e+00 : f32
    %76 = vector.broadcast %cst_50 : f32 to vector<8x1xf32>
    %77 = arith.addf %76, %75 : vector<8x1xf32>
    %78 = arith.divf %76, %77 : vector<8x1xf32>
    %79 = vector.shape_cast %78 : vector<8x1xf32> to vector<8x1xf32>
    %80 = vector.broadcast %79 : vector<8x1xf32> to vector<8x112xf32>
    %81 = tpu.concatenate %65, %80 in 1 : vector<8x16xf32>, vector<8x112xf32> -> vector<8x128xf32>
    %c0_51 = arith.constant 0 : index
    %c0_52 = arith.constant 0 : index
    %82 = vector.load %arg17[%c0_51, %c0_52] : memref<8x128xf32, #tpu.memory_space<vmem>>, vector<8x128xf32>
    tpu.vector_store %arg17[%c0_51, %c0_52], %81 {strides = array<i32>} : memref<8x128xf32, #tpu.memory_space<vmem>>, vector<8x128xf32>,
    return
  }
}

</mosaic_0001>

<llo_original>
// kernel: gcnmk_forward.1
$region0: #{gcnmk_forward.1}
  #allocation0 [shape = 'u32[]', space=smem, size = 0x4, offset = 0x4, fixed_abs, tag = 'smem constant byte address 0x4 - core index']
  #allocation1 [shape = 'u32[144,128]{1,0:T(1,128)}', space=vmem, size = 0x12000, scoped, tag = 'internal scratch']
  #allocation2 [shape = 'f32[1,1]{1,0:T(1,128)S(1)}', space=vmem, size = 0x200, scoped, tag = 'scoped memory for gcnmk_forward.1']
  %s0 = inlined_call_operand.vmem [shape: s32[8,2], index: 0, kind: input, shape index: {}]
  %s1 = inlined_call_operand.vmem [shape: f32[16,8], index: 1, kind: input, shape index: {}]
  %s2 = inlined_call_operand.vmem [shape: f32[16,16], index: 2, kind: input, shape index: {}]
  %s3 = inlined_call_operand.vmem [shape: f32[16,16], index: 3, kind: input, shape index: {}]
  %s4 = inlined_call_operand.vmem [shape: f32[8,128], index: 4, kind: input, shape index: {}]
  %s5 = inlined_call_operand.vmem [shape: f32[1,32], index: 5, kind: input, shape index: {}]
  %s6 = inlined_call_operand.vmem [shape: f32[1,32], index: 6, kind: input, shape index: {}]
  %s7 = inlined_call_operand.vmem [shape: f32[32,16], index: 7, kind: input, shape index: {}]
  %s8 = inlined_call_operand.vmem [shape: f32[32,16], index: 8, kind: input, shape index: {}]
  %s9 = inlined_call_operand.vmem [shape: f32[1,16], index: 9, kind: input, shape index: {}]
  %s10 = inlined_call_operand.vmem [shape: f32[32,32], index: 10, kind: input, shape index: {}]
  %s11 = inlined_call_operand.vmem [shape: f32[1,32], index: 11, kind: input, shape index: {}]
  %s12 = inlined_call_operand.vmem [shape: f32[32,16], index: 12, kind: input, shape index: {}]
  %s13 = inlined_call_operand.vmem [shape: f32[1,16], index: 13, kind: input, shape index: {}]
  %s14 = inlined_call_operand.vmem [shape: f32[1,16], index: 14, kind: input, shape index: {}]
  %s15 = inlined_call_operand.<no memory space> [shape: f32[1,1], index: 15, kind: input, shape index: {}]
  %s16 = inlined_call_operand.hbm [shape: f32[16,16], index: 16, kind: output, shape index: {0}]
  %s17 = inlined_call_operand.vmem [shape: f32[8,128], index: 17, kind: output, shape index: {1}]
  %18 = xla_tuple %s16, %s17
  %s19 = sld [smem:[#allocation0]]
  $region82: #{gcnmk_forward.1} parent=0
    _
  %s21 = ssub.s32 1, %s19
  %s22 = scalar_select 0, %s21, %s19
  %v23 = vstv %s15
  %24 = vst [vmem:[#allocation2] sm:$0x1] %v23
  $region1: #{gcnmk_forward.1} parent=0
    #allocation3 [shape = 'u8[8192]{0}', space=vmem, size = 0x2000, scoped, tag = 'output window, operand 0, single buffered']
    #allocation4 [shape = 's32[1]{0}', space=sflag, size = 0x4, scoped, tag = 'scoped memory for gcnmk_forward.1']
    %25 = vsyncpa [#allocation4], 0
    // Predicated region
    $region2: #{gcnmk_forward.1} parent=1 // pred_check
      _
    $region3: #{gcnmk_forward.1} parent=1 // pred_check_branch
      %27 = sbr.rel (0) target = $region5
    $region4: #{gcnmk_forward.1} parent=1 // pred_region
      _
    $region5: #{gcnmk_forward.1} parent=1 // pred_fallthru
      _
    // Predicated region
    $region6: #{gcnmk_forward.1} parent=1 // pred_check
      _
    $region7: #{gcnmk_forward.1} parent=1 // pred_check_branch
      %29 = sbr.rel (0) target = $region9
    $region8: #{gcnmk_forward.1} parent=1 // pred_region
      _
    $region9: #{gcnmk_forward.1} parent=1 // pred_fallthru
      _
    // Predicated region
    $region10: #{gcnmk_forward.1} parent=1 // pred_check
      _
    $region11: #{gcnmk_forward.1} parent=1 // pred_check_branch
      %31 = sbr.rel (0) target = $region13
    $region12: #{gcnmk_forward.1} parent=1 // pred_region
      _
    $region13: #{gcnmk_forward.1} parent=1 // pred_fallthru
      _
    // Predicated region
    $region14: #{gcnmk_forward.1} parent=1 // pred_check
      _
    $region15: #{gcnmk_forward.1} parent=1 // pred_check_branch
      %33 = sbr.rel (0) target = $region17
    $region16: #{gcnmk_forward.1} parent=1 // pred_region
      _
    $region17: #{gcnmk_forward.1} parent=1 // pred_fallthru
      _
    // Predicated region
    $region18: #{gcnmk_forward.1} parent=1 // pred_check
      _
    $region19: #{gcnmk_forward.1} parent=1 // pred_check_branch
      %35 = sbr.rel (0) target = $region21
    $region20: #{gcnmk_forward.1} parent=1 // pred_region
      _
    $region21: #{gcnmk_forward.1} parent=1 // pred_fallthru
      _
    // Predicated region
    $region22: #{gcnmk_forward.1} parent=1 // pred_check
      _
    $region23: #{gcnmk_forward.1} parent=1 // pred_check_branch
      %37 = sbr.rel (0) target = $region25
    $region24: #{gcnmk_forward.1} parent=1 // pred_region
      _
    $region25: #{gcnmk_forward.1} parent=1 // pred_fallthru
      _
    // Predicated region
    $region26: #{gcnmk_forward.1} parent=1 // pred_check
      _
    $region27: #{gcnmk_forward.1} parent=1 // pred_check_branch
      %39 = sbr.rel (0) target = $region29
    $region28: #{gcnmk_forward.1} parent=1 // pred_region
      _
    $region29: #{gcnmk_forward.1} parent=1 // pred_fallthru
      _
    // Predicated region
    $region30: #{gcnmk_forward.1} parent=1 // pred_check
      _
    $region31: #{gcnmk_forward.1} parent=1 // pred_check_branch
      %41 = sbr.rel (0) target = $region33
    $region32: #{gcnmk_forward.1} parent=1 // pred_region
      _
    $region33: #{gcnmk_forward.1} parent=1 // pred_fallthru
      _
    // Predicated region
    $region34: #{gcnmk_forward.1} parent=1 // pred_check
      _
    $region35: #{gcnmk_forward.1} parent=1 // pred_check_branch
      %43 = sbr.rel (0) target = $region37
    $region36: #{gcnmk_forward.1} parent=1 // pred_region
      _
    $region37: #{gcnmk_forward.1} parent=1 // pred_fallthru
      _
    // Predicated region
    $region38: #{gcnmk_forward.1} parent=1 // pred_check
      _
    $region39: #{gcnmk_forward.1} parent=1 // pred_check_branch
      %45 = sbr.rel (0) target = $region41
    $region40: #{gcnmk_forward.1} parent=1 // pred_region
      _
    $region41: #{gcnmk_forward.1} parent=1 // pred_fallthru
      _
    // Predicated region
    $region42: #{gcnmk_forward.1} parent=1 // pred_check
      _
    $region43: #{gcnmk_forward.1} parent=1 // pred_check_branch
      %47 = sbr.rel (0) target = $region45
    $region44: #{gcnmk_forward.1} parent=1 // pred_region
      _
    $region45: #{gcnmk_forward.1} parent=1 // pred_fallthru
      _
    // Predicated region
    $region46: #{gcnmk_forward.1} parent=1 // pred_check
      _
    $region47: #{gcnmk_forward.1} parent=1 // pred_check_branch
      %49 = sbr.rel (0) target = $region49
    $region48: #{gcnmk_forward.1} parent=1 // pred_region
      _
    $region49: #{gcnmk_forward.1} parent=1 // pred_fallthru
      _
    // Predicated region
    $region50: #{gcnmk_forward.1} parent=1 // pred_check
      _
    $region51: #{gcnmk_forward.1} parent=1 // pred_check_branch
      %51 = sbr.rel (0) target = $region53
    $region52: #{gcnmk_forward.1} parent=1 // pred_region
      _
    $region53: #{gcnmk_forward.1} parent=1 // pred_fallthru
      _
    // Predicated region
    $region54: #{gcnmk_forward.1} parent=1 // pred_check
      _
    $region55: #{gcnmk_forward.1} parent=1 // pred_check_branch
      %53 = sbr.rel (0) target = $region57
    $region56: #{gcnmk_forward.1} parent=1 // pred_region
      _
    $region57: #{gcnmk_forward.1} parent=1 // pred_fallthru
      _
    // Predicated region
    $region58: #{gcnmk_forward.1} parent=1 // pred_check
      _
    $region59: #{gcnmk_forward.1} parent=1 // pred_check_branch
      %55 = sbr.rel (0) target = $region61
    $region60: #{gcnmk_forward.1} parent=1 // pred_region
      _
    $region61: #{gcnmk_forward.1} parent=1 // pred_fallthru
      _
    // Predicated region
    $region62: #{gcnmk_forward.1} parent=1 // pred_check
      _
    $region63: #{gcnmk_forward.1} parent=1 // pred_check_branch
      %57 = sbr.rel (0) target = $region65
    $region64: #{gcnmk_forward.1} parent=1 // pred_region
      _
    $region65: #{gcnmk_forward.1} parent=1 // pred_fallthru
      _
    %v58 = vld [vmem:[%s2] sm:$0xff]
    %v59 = vld [vmem:[%s2 + $0x8] sm:$0xff]
    %v60 = vld [vmem:[%s3] sm:$0xff]
    %v61 = vld [vmem:[%s3 + $0x8] sm:$0xff]
    %v62 = vld [vmem:[%s1] sm:$0xff]
    %v63 = vld [vmem:[%s1 + $0x8] sm:$0xff]
    %v64 = vld [vmem:[%s4] sm:$0xff]
    %vm65 = vcmask 64512
    %v67 = vsel %vm65, %v62, 0
    %v70 = vsel %vm65, %v63, 0
    %72 = vmatprep.subr.mxu0 0.0
    %73 = vmatpush1.msra.mxu0 %v64
    %74 = vmatprep.subr.mxu0 0.0
    %75 = vmatpush1.msra.mxu0 0.0
    %76 = vmatprep.subr.mxu0 0.0
    %77 = vmatpush1.msra.mxu0 0.0
    %78 = vmatprep.subr.mxu0 0.0
    %79 = vmatpush1.msra.mxu0 0.0
    %80 = vmatprep.subr.mxu0 0.0
    %81 = vmatpush1.msra.mxu0 0.0
    %82 = vmatprep.subr.mxu0 0.0
    %83 = vmatpush1.msra.mxu0 0.0
    %84 = vmatprep.subr.mxu0 0.0
    %85 = vmatpush1.msra.mxu0 0.0
    %86 = vmatprep.subr.mxu0 0.0
    %87 = vmatpush1.msra.mxu0 0.0
    %88 = vmatprep.subr.mxu0 0.0
    %89 = vmatpush1.msra.mxu0 0.0
    %90 = vmatprep.subr.mxu0 0.0
    %91 = vmatpush1.msra.mxu0 0.0
    %92 = vmatprep.subr.mxu0 0.0
    %93 = vmatpush1.msra.mxu0 0.0
    %94 = vmatprep.subr.mxu0 0.0
    %95 = vmatpush1.msra.mxu0 0.0
    %96 = vmatprep.subr.mxu0 0.0
    %97 = vmatpush1.msra.mxu0 0.0
    %98 = vmatprep.subr.mxu0 0.0
    %99 = vmatpush1.msra.mxu0 0.0
    %100 = vmatprep.subr.mxu0 0.0
    %101 = vmatpush1.msra.mxu0 0.0
    %102 = vmatprep.subr.mxu0 0.0
    %103 = vmatpush1.msra.mxu0 0.0
    %104 = vmatprep.subr.mxu0 0.0
    %105 = vmatpush1.msra.mxu0 0.0
    %106 = vmatprep.subr.mxu0 0.0
    %107 = vmatpush1.msra.mxu0 0.0
    %108 = vmatprep.subr.mxu0 0.0
    %109 = vmatpush1.msra.mxu0 0.0
    %110 = vmatprep.subr.mxu0 0.0
    %111 = vmatpush1.msra.mxu0 0.0
    %112 = vmatprep.subr.mxu0 0.0
    %113 = vmatpush1.msra.mxu0 0.0
    %114 = vmatprep.subr.mxu0 0.0
    %115 = vmatpush1.msra.mxu0 0.0
    %116 = vmatprep.subr.mxu0 0.0
    %117 = vmatpush1.msra.mxu0 0.0
    %118 = vmatprep.subr.mxu0 0.0
    %119 = vmatpush1.msra.mxu0 0.0
    %120 = vmatprep.subr.mxu0 0.0
    %121 = vmatpush1.msra.mxu0 0.0
    %122 = vmatprep.subr.mxu0 0.0
    %123 = vmatpush1.msra.mxu0 0.0
    %124 = vmatprep.subr.mxu0 0.0
    %125 = vmatpush1.msra.mxu0 0.0
    %126 = vmatprep.subr.mxu0 0.0
    %127 = vmatpush1.msra.mxu0 0.0
    %128 = vmatprep.subr.mxu0 0.0
    %129 = vmatpush1.msra.mxu0 0.0
    %130 = vmatprep.subr.mxu0 0.0
    %131 = vmatpush1.msra.mxu0 0.0
    %132 = vmatprep.subr.mxu0 0.0
    %133 = vmatpush1.msra.mxu0 0.0
    %134 = vmatprep.subr.mxu0 0.0
    %135 = vmatpush1.msra.mxu0 0.0
    %136 = vmatprep.mubr.f32.mxu0 0.0
    %137 = vmatmul.mubr.f32.gmra.mrb[0].mxu0 %v67
    %v138 = vpop.f32.mrb[0].mxu0
    %v139 = vadd.f32 0.0, %v138
    %v140 = vpop.f32.mrb[0].mxu0
    %141 = vmatprep.mubr.f32.mxu0 0.0
    %142 = vmatmul.mubr.f32.gmra.mrb[0].mxu0 %v70
    %v143 = vpop.f32.mrb[0].mxu0
    %v144 = vadd.f32 0.0, %v143
    %v145 = vpop.f32.mrb[0].mxu0
    %146 = vdwg.mxu0
    %vm147 = vcmask 130048
    %v149 = vsel %vm147, %v58, 0
    %v152 = vsel %vm147, %v59, 0
    %154 = vmatprep.subr.mxu0 0.0
    %155 = vmatpush1.msra.mxu0 %v139
    %156 = vmatprep.subr.mxu0 0.0
    %157 = vmatpush1.msra.mxu0 %v144
    %158 = vmatprep.subr.mxu0 0.0
    %159 = vmatpush1.msra.mxu0 0.0
    %160 = vmatprep.subr.mxu0 0.0
    %161 = vmatpush1.msra.mxu0 0.0
    %162 = vmatprep.subr.mxu0 0.0
    %163 = vmatpush1.msra.mxu0 0.0
    %164 = vmatprep.subr.mxu0 0.0
    %165 = vmatpush1.msra.mxu0 0.0
    %166 = vmatprep.subr.mxu0 0.0
    %167 = vmatpush1.msra.mxu0 0.0
    %168 = vmatprep.subr.mxu0 0.0
    %169 = vmatpush1.msra.mxu0 0.0
    %170 = vmatprep.subr.mxu0 0.0
    %171 = vmatpush1.msra.mxu0 0.0
    %172 = vmatprep.subr.mxu0 0.0
    %173 = vmatpush1.msra.mxu0 0.0
    %174 = vmatprep.subr.mxu0 0.0
    %175 = vmatpush1.msra.mxu0 0.0
    %176 = vmatprep.subr.mxu0 0.0
    %177 = vmatpush1.msra.mxu0 0.0
    %178 = vmatprep.subr.mxu0 0.0
    %179 = vmatpush1.msra.mxu0 0.0
    %180 = vmatprep.subr.mxu0 0.0
    %181 = vmatpush1.msra.mxu0 0.0
    %182 = vmatprep.subr.mxu0 0.0
    %183 = vmatpush1.msra.mxu0 0.0
    %184 = vmatprep.subr.mxu0 0.0
    %185 = vmatpush1.msra.mxu0 0.0
    %186 = vmatprep.subr.mxu0 0.0
    %187 = vmatpush1.msra.mxu0 0.0
    %188 = vmatprep.subr.mxu0 0.0
    %189 = vmatpush1.msra.mxu0 0.0
    %190 = vmatprep.subr.mxu0 0.0
    %191 = vmatpush1.msra.mxu0 0.0
    %192 = vmatprep.subr.mxu0 0.0
    %193 = vmatpush1.msra.mxu0 0.0
    %194 = vmatprep.subr.mxu0 0.0
    %195 = vmatpush1.msra.mxu0 0.0
    %196 = vmatprep.subr.mxu0 0.0
    %197 = vmatpush1.msra.mxu0 0.0
    %198 = vmatprep.subr.mxu0 0.0
    %199 = vmatpush1.msra.mxu0 0.0
    %200 = vmatprep.subr.mxu0 0.0
    %201 = vmatpush1.msra.mxu0 0.0
    %202 = vmatprep.subr.mxu0 0.0
    %203 = vmatpush1.msra.mxu0 0.0
    %204 = vmatprep.subr.mxu0 0.0
    %205 = vmatpush1.msra.mxu0 0.0
    %206 = vmatprep.subr.mxu0 0.0
    %207 = vmatpush1.msra.mxu0 0.0
    %208 = vmatprep.subr.mxu0 0.0
    %209 = vmatpush1.msra.mxu0 0.0
    %210 = vmatprep.subr.mxu0 0.0
    %211 = vmatpush1.msra.mxu0 0.0
    %212 = vmatprep.subr.mxu0 0.0
    %213 = vmatpush1.msra.mxu0 0.0
    %214 = vmatprep.subr.mxu0 0.0
    %215 = vmatpush1.msra.mxu0 0.0
    %216 = vmatprep.subr.mxu0 0.0
    %217 = vmatpush1.msra.mxu0 0.0
    %218 = vmatprep.mubr.f32.mxu0 0.0
    %219 = vmatmul.mubr.f32.gmra.mrb[0].mxu0 %v149
    %v220 = vpop.f32.mrb[0].mxu0
    %v221 = vadd.f32 0.0, %v220
    %v222 = vpop.f32.mrb[0].mxu0
    %223 = vmatprep.mubr.f32.mxu0 0.0
    %224 = vmatmul.mubr.f32.gmra.mrb[0].mxu0 %v152
    %v225 = vpop.f32.mrb[0].mxu0
    %v226 = vadd.f32 0.0, %v225
    %v227 = vpop.f32.mrb[0].mxu0
    %228 = vdwg.mxu0
    %231 = vrot.lane.b32.xlu0 %v139, 64
    %v232 = vpop.permute.xlu0 %231
    %233 = vrot.lane.b32.xlu0 %v144, 64
    %v234 = vpop.permute.xlu0 %233
    %v238 = vsel %vm147, %v60, 0
    %v241 = vsel %vm147, %v61, 0
    %243 = vmatprep.subr.mxu0 0.0
    %244 = vmatpush1.msra.mxu0 %v232
    %245 = vmatprep.subr.mxu0 0.0
    %246 = vmatpush1.msra.mxu0 %v234
    %247 = vmatprep.subr.mxu0 0.0
    %248 = vmatpush1.msra.mxu0 0.0
    %249 = vmatprep.subr.mxu0 0.0
    %250 = vmatpush1.msra.mxu0 0.0
    %251 = vmatprep.subr.mxu0 0.0
    %252 = vmatpush1.msra.mxu0 0.0
    %253 = vmatprep.subr.mxu0 0.0
    %254 = vmatpush1.msra.mxu0 0.0
    %255 = vmatprep.subr.mxu0 0.0
    %256 = vmatpush1.msra.mxu0 0.0
    %257 = vmatprep.subr.mxu0 0.0
    %258 = vmatpush1.msra.mxu0 0.0
    %259 = vmatprep.subr.mxu0 0.0
    %260 = vmatpush1.msra.mxu0 0.0
    %261 = vmatprep.subr.mxu0 0.0
    %262 = vmatpush1.msra.mxu0 0.0
    %263 = vmatprep.subr.mxu0 0.0
    %264 = vmatpush1.msra.mxu0 0.0
    %265 = vmatprep.subr.mxu0 0.0
    %266 = vmatpush1.msra.mxu0 0.0
    %267 = vmatprep.subr.mxu0 0.0
    %268 = vmatpush1.msra.mxu0 0.0
    %269 = vmatprep.subr.mxu0 0.0
    %270 = vmatpush1.msra.mxu0 0.0
    %271 = vmatprep.subr.mxu0 0.0
    %272 = vmatpush1.msra.mxu0 0.0
    %273 = vmatprep.subr.mxu0 0.0
    %274 = vmatpush1.msra.mxu0 0.0
    %275 = vmatprep.subr.mxu0 0.0
    %276 = vmatpush1.msra.mxu0 0.0
    %277 = vmatprep.subr.mxu0 0.0
    %278 = vmatpush1.msra.mxu0 0.0
    %279 = vmatprep.subr.mxu0 0.0
    %280 = vmatpush1.msra.mxu0 0.0
    %281 = vmatprep.subr.mxu0 0.0
    %282 = vmatpush1.msra.mxu0 0.0
    %283 = vmatprep.subr.mxu0 0.0
    %284 = vmatpush1.msra.mxu0 0.0
    %285 = vmatprep.subr.mxu0 0.0
    %286 = vmatpush1.msra.mxu0 0.0
    %287 = vmatprep.subr.mxu0 0.0
    %288 = vmatpush1.msra.mxu0 0.0
    %289 = vmatprep.subr.mxu0 0.0
    %290 = vmatpush1.msra.mxu0 0.0
    %291 = vmatprep.subr.mxu0 0.0
    %292 = vmatpush1.msra.mxu0 0.0
    %293 = vmatprep.subr.mxu0 0.0
    %294 = vmatpush1.msra.mxu0 0.0
    %295 = vmatprep.subr.mxu0 0.0
    %296 = vmatpush1.msra.mxu0 0.0
    %297 = vmatprep.subr.mxu0 0.0
    %298 = vmatpush1.msra.mxu0 0.0
    %299 = vmatprep.subr.mxu0 0.0
    %300 = vmatpush1.msra.mxu0 0.0
    %301 = vmatprep.subr.mxu0 0.0
    %302 = vmatpush1.msra.mxu0 0.0
    %303 = vmatprep.subr.mxu0 0.0
    %304 = vmatpush1.msra.mxu0 0.0
    %305 = vmatprep.subr.mxu0 0.0
    %306 = vmatpush1.msra.mxu0 0.0
    %307 = vmatprep.mubr.f32.mxu0 0.0
    %308 = vmatmul.mubr.f32.gmra.mrb[0].mxu0 %v238
    %v309 = vpop.f32.mrb[0].mxu0
    %v310 = vadd.f32 0.0, %v309
    %v311 = vpop.f32.mrb[0].mxu0
    %312 = vmatprep.mubr.f32.mxu0 0.0
    %313 = vmatmul.mubr.f32.gmra.mrb[0].mxu0 %v241
    %v314 = vpop.f32.mrb[0].mxu0
    %v315 = vadd.f32 0.0, %v314
    %v316 = vpop.f32.mrb[0].mxu0
    %317 = vdwg.mxu0
    %v318 = vadd.f32 %v221, %v310
    %v319 = vadd.f32 %v226, %v315
    %v320 = vld [vmem:[%s5] sm:$0x1]
    %v322 = vlaneseq
    %v323 = vshrl.u32 %v322, 7
    %v324 = vsub.s32 0, %v323
    %v325 = vrot.slane %v320, %v324
    %v327 = vadd.f32 %v318, %v325
    %v328 = vadd.f32 %v319, %v325
    %v329 = vmax.f32 %v327, 0.0
    %v330 = vmax.f32 %v328, 0.0
    %v331 = vld [vmem:[%s6] sm:$0x1]
    %v333 = vlaneseq
    %v334 = vshrl.u32 %v333, 7
    %v335 = vsub.s32 0, %v334
    %v336 = vrot.slane %v331, %v335
    %337 = vrot.lane.b32.xlu0 %v336, 32
    %v338 = vpop.permute.xlu0 %337
    %v340 = vadd.f32 %v318, %v338
    %v341 = vadd.f32 %v319, %v338
    %v342 = vmax.f32 %v340, 0.0
    %v343 = vmax.f32 %v341, 0.0
    %v344 = vld [vmem:[%s7] sm:$0xff]
    %v345 = vld [vmem:[%s7 + $0x8] sm:$0xff]
    %v346 = vld [vmem:[%s7 + $0x10] sm:$0xff]
    %v347 = vld [vmem:[%s7 + $0x18] sm:$0xff]
    %vm348 = vcmask 261120
    %v350 = vsel %vm348, %v329, 0
    %v353 = vsel %vm348, %v330, 0
    %355 = vmatprep.subr.mxu0 0.0
    %356 = vmatpush1.msra.mxu0 %v344
    %357 = vmatprep.subr.mxu0 0.0
    %358 = vmatpush1.msra.mxu0 %v345
    %359 = vmatprep.subr.mxu0 0.0
    %360 = vmatpush1.msra.mxu0 %v346
    %361 = vmatprep.subr.mxu0 0.0
    %362 = vmatpush1.msra.mxu0 %v347
    %363 = vmatprep.subr.mxu0 0.0
    %364 = vmatpush1.msra.mxu0 0.0
    %365 = vmatprep.subr.mxu0 0.0
    %366 = vmatpush1.msra.mxu0 0.0
    %367 = vmatprep.subr.mxu0 0.0
    %368 = vmatpush1.msra.mxu0 0.0
    %369 = vmatprep.subr.mxu0 0.0
    %370 = vmatpush1.msra.mxu0 0.0
    %371 = vmatprep.subr.mxu0 0.0
    %372 = vmatpush1.msra.mxu0 0.0
    %373 = vmatprep.subr.mxu0 0.0
    %374 = vmatpush1.msra.mxu0 0.0
    %375 = vmatprep.subr.mxu0 0.0
    %376 = vmatpush1.msra.mxu0 0.0
    %377 = vmatprep.subr.mxu0 0.0
    %378 = vmatpush1.msra.mxu0 0.0
    %379 = vmatprep.subr.mxu0 0.0
    %380 = vmatpush1.msra.mxu0 0.0
    %381 = vmatprep.subr.mxu0 0.0
    %382 = vmatpush1.msra.mxu0 0.0
    %383 = vmatprep.subr.mxu0 0.0
    %384 = vmatpush1.msra.mxu0 0.0
    %385 = vmatprep.subr.mxu0 0.0
    %386 = vmatpush1.msra.mxu0 0.0
    %387 = vmatprep.subr.mxu0 0.0
    %388 = vmatpush1.msra.mxu0 0.0
    %389 = vmatprep.subr.mxu0 0.0
    %390 = vmatpush1.msra.mxu0 0.0
    %391 = vmatprep.subr.mxu0 0.0
    %392 = vmatpush1.msra.mxu0 0.0
    %393 = vmatprep.subr.mxu0 0.0
    %394 = vmatpush1.msra.mxu0 0.0
    %395 = vmatprep.subr.mxu0 0.0
    %396 = vmatpush1.msra.mxu0 0.0
    %397 = vmatprep.subr.mxu0 0.0
    %398 = vmatpush1.msra.mxu0 0.0
    %399 = vmatprep.subr.mxu0 0.0
    %400 = vmatpush1.msra.mxu0 0.0
    %401 = vmatprep.subr.mxu0 0.0
    %402 = vmatpush1.msra.mxu0 0.0
    %403 = vmatprep.subr.mxu0 0.0
    %404 = vmatpush1.msra.mxu0 0.0
    %405 = vmatprep.subr.mxu0 0.0
    %406 = vmatpush1.msra.mxu0 0.0
    %407 = vmatprep.subr.mxu0 0.0
    %408 = vmatpush1.msra.mxu0 0.0
    %409 = vmatprep.subr.mxu0 0.0
    %410 = vmatpush1.msra.mxu0 0.0
    %411 = vmatprep.subr.mxu0 0.0
    %412 = vmatpush1.msra.mxu0 0.0
    %413 = vmatprep.subr.mxu0 0.0
    %414 = vmatpush1.msra.mxu0 0.0
    %415 = vmatprep.subr.mxu0 0.0
    %416 = vmatpush1.msra.mxu0 0.0
    %417 = vmatprep.subr.mxu0 0.0
    %418 = vmatpush1.msra.mxu0 0.0
    %419 = vmatprep.mubr.f32.mxu0 0.0
    %420 = vmatmul.mubr.f32.gmra.mrb[0].mxu0 %v350
    %v421 = vpop.f32.mrb[0].mxu0
    %v422 = vadd.f32 0.0, %v421
    %v423 = vpop.f32.mrb[0].mxu0
    %424 = vmatprep.mubr.f32.mxu0 0.0
    %425 = vmatmul.mubr.f32.gmra.mrb[0].mxu0 %v353
    %v426 = vpop.f32.mrb[0].mxu0
    %v427 = vadd.f32 0.0, %v426
    %v428 = vpop.f32.mrb[0].mxu0
    %429 = vdwg.mxu0
    %v430 = vld [vmem:[%s8] sm:$0xff]
    %v431 = vld [vmem:[%s8 + $0x8] sm:$0xff]
    %v432 = vld [vmem:[%s8 + $0x10] sm:$0xff]
    %v433 = vld [vmem:[%s8 + $0x18] sm:$0xff]
    %436 = vrot.lane.b32.xlu0 %v342, 96
    %v437 = vpop.permute.xlu0 %436
    %438 = vrot.lane.b32.xlu0 %v343, 96
    %v439 = vpop.permute.xlu0 %438
    %v440 = vsel %vm348, %v437, 0
    %v442 = vsel %vm348, %v439, 0
    %444 = vmatprep.subr.mxu0 0.0
    %445 = vmatpush1.msra.mxu0 %v430
    %446 = vmatprep.subr.mxu0 0.0
    %447 = vmatpush1.msra.mxu0 %v431
    %448 = vmatprep.subr.mxu0 0.0
    %449 = vmatpush1.msra.mxu0 %v432
    %450 = vmatprep.subr.mxu0 0.0
    %451 = vmatpush1.msra.mxu0 %v433
    %452 = vmatprep.subr.mxu0 0.0
    %453 = vmatpush1.msra.mxu0 0.0
    %454 = vmatprep.subr.mxu0 0.0
    %455 = vmatpush1.msra.mxu0 0.0
    %456 = vmatprep.subr.mxu0 0.0
    %457 = vmatpush1.msra.mxu0 0.0
    %458 = vmatprep.subr.mxu0 0.0
    %459 = vmatpush1.msra.mxu0 0.0
    %460 = vmatprep.subr.mxu0 0.0
    %461 = vmatpush1.msra.mxu0 0.0
    %462 = vmatprep.subr.mxu0 0.0
    %463 = vmatpush1.msra.mxu0 0.0
    %464 = vmatprep.subr.mxu0 0.0
    %465 = vmatpush1.msra.mxu0 0.0
    %466 = vmatprep.subr.mxu0 0.0
    %467 = vmatpush1.msra.mxu0 0.0
    %468 = vmatprep.subr.mxu0 0.0
    %469 = vmatpush1.msra.mxu0 0.0
    %470 = vmatprep.subr.mxu0 0.0
    %471 = vmatpush1.msra.mxu0 0.0
    %472 = vmatprep.subr.mxu0 0.0
    %473 = vmatpush1.msra.mxu0 0.0
    %474 = vmatprep.subr.mxu0 0.0
    %475 = vmatpush1.msra.mxu0 0.0
    %476 = vmatprep.subr.mxu0 0.0
    %477 = vmatpush1.msra.mxu0 0.0
    %478 = vmatprep.subr.mxu0 0.0
    %479 = vmatpush1.msra.mxu0 0.0
    %480 = vmatprep.subr.mxu0 0.0
    %481 = vmatpush1.msra.mxu0 0.0
    %482 = vmatprep.subr.mxu0 0.0
    %483 = vmatpush1.msra.mxu0 0.0
    %484 = vmatprep.subr.mxu0 0.0
    %485 = vmatpush1.msra.mxu0 0.0
    %486 = vmatprep.subr.mxu0 0.0
    %487 = vmatpush1.msra.mxu0 0.0
    %488 = vmatprep.subr.mxu0 0.0
    %489 = vmatpush1.msra.mxu0 0.0
    %490 = vmatprep.subr.mxu0 0.0
    %491 = vmatpush1.msra.mxu0 0.0
    %492 = vmatprep.subr.mxu0 0.0
    %493 = vmatpush1.msra.mxu0 0.0
    %494 = vmatprep.subr.mxu0 0.0
    %495 = vmatpush1.msra.mxu0 0.0
    %496 = vmatprep.subr.mxu0 0.0
    %497 = vmatpush1.msra.mxu0 0.0
    %498 = vmatprep.subr.mxu0 0.0
    %499 = vmatpush1.msra.mxu0 0.0
    %500 = vmatprep.subr.mxu0 0.0
    %501 = vmatpush1.msra.mxu0 0.0
    %502 = vmatprep.subr.mxu0 0.0
    %503 = vmatpush1.msra.mxu0 0.0
    %504 = vmatprep.subr.mxu0 0.0
    %505 = vmatpush1.msra.mxu0 0.0
    %506 = vmatprep.subr.mxu0 0.0
    %507 = vmatpush1.msra.mxu0 0.0
    %508 = vmatprep.mubr.f32.mxu0 0.0
    %509 = vmatmul.mubr.f32.gmra.mrb[0].mxu0 %v440
    %v510 = vpop.f32.mrb[0].mxu0
    %v511 = vadd.f32 0.0, %v510
    %v512 = vpop.f32.mrb[0].mxu0
    %513 = vmatprep.mubr.f32.mxu0 0.0
    %514 = vmatmul.mubr.f32.gmra.mrb[0].mxu0 %v442
    %v515 = vpop.f32.mrb[0].mxu0
    %v516 = vadd.f32 0.0, %v515
    %v517 = vpop.f32.mrb[0].mxu0
    %518 = vdwg.mxu0
    %519 = vmatprep.subr.mxu0 0.0
    %520 = vmatpush1.msra.mxu0 %v511
    %521 = vmatprep.subr.mxu0 0.0
    %522 = vmatpush1.msra.mxu0 %v516
    %523 = vmatprep.subr.mxu0 0.0
    %524 = vmatpush1.msra.mxu0 0.0
    %525 = vmatprep.subr.mxu0 0.0
    %526 = vmatpush1.msra.mxu0 0.0
    %527 = vmatprep.subr.mxu0 0.0
    %528 = vmatpush1.msra.mxu0 0.0
    %529 = vmatprep.subr.mxu0 0.0
    %530 = vmatpush1.msra.mxu0 0.0
    %531 = vmatprep.subr.mxu0 0.0
    %532 = vmatpush1.msra.mxu0 0.0
    %533 = vmatprep.subr.mxu0 0.0
    %534 = vmatpush1.msra.mxu0 0.0
    %535 = vmatprep.subr.mxu0 0.0
    %536 = vmatpush1.msra.mxu0 0.0
    %537 = vmatprep.subr.mxu0 0.0
    %538 = vmatpush1.msra.mxu0 0.0
    %539 = vmatprep.subr.mxu0 0.0
    %540 = vmatpush1.msra.mxu0 0.0
    %541 = vmatprep.subr.mxu0 0.0
    %542 = vmatpush1.msra.mxu0 0.0
    %543 = vmatprep.subr.mxu0 0.0
    %544 = vmatpush1.msra.mxu0 0.0
    %545 = vmatprep.subr.mxu0 0.0
    %546 = vmatpush1.msra.mxu0 0.0
    %547 = vmatprep.subr.mxu0 0.0
    %548 = vmatpush1.msra.mxu0 0.0
    %549 = vmatprep.subr.mxu0 0.0
    %550 = vmatpush1.msra.mxu0 0.0
    %551 = vmatprep.subr.mxu0 0.0
    %552 = vmatpush1.msra.mxu0 0.0
    %553 = vmatprep.subr.mxu0 0.0
    %554 = vmatpush1.msra.mxu0 0.0
    %555 = vmatprep.subr.mxu0 0.0
    %556 = vmatpush1.msra.mxu0 0.0
    %557 = vmatprep.subr.mxu0 0.0
    %558 = vmatpush1.msra.mxu0 0.0
    %559 = vmatprep.subr.mxu0 0.0
    %560 = vmatpush1.msra.mxu0 0.0
    %561 = vmatprep.subr.mxu0 0.0
    %562 = vmatpush1.msra.mxu0 0.0
    %563 = vmatprep.subr.mxu0 0.0
    %564 = vmatpush1.msra.mxu0 0.0
    %565 = vmatprep.subr.mxu0 0.0
    %566 = vmatpush1.msra.mxu0 0.0
    %567 = vmatprep.subr.mxu0 0.0
    %568 = vmatpush1.msra.mxu0 0.0
    %569 = vmatprep.subr.mxu0 0.0
    %570 = vmatpush1.msra.mxu0 0.0
    %571 = vmatprep.subr.mxu0 0.0
    %572 = vmatpush1.msra.mxu0 0.0
    %573 = vmatprep.subr.mxu0 0.0
    %574 = vmatpush1.msra.mxu0 0.0
    %575 = vmatprep.subr.mxu0 0.0
    %576 = vmatpush1.msra.mxu0 0.0
    %577 = vmatprep.subr.mxu0 0.0
    %578 = vmatpush1.msra.mxu0 0.0
    %579 = vmatprep.subr.mxu0 0.0
    %580 = vmatpush1.msra.mxu0 0.0
    %581 = vmatprep.subr.mxu0 0.0
    %582 = vmatpush1.msra.mxu0 0.0
    %583 = vmatprep.mubr.f32.mxu0 0.0
    %584 = vmatmul.mubr.f32.gmra.mrb[0].mxu0 %v238
    %v585 = vpop.f32.mrb[0].mxu0
    %v586 = vadd.f32 0.0, %v585
    %v587 = vpop.f32.mrb[0].mxu0
    %588 = vmatprep.mubr.f32.mxu0 0.0
    %589 = vmatmul.mubr.f32.gmra.mrb[0].mxu0 %v241
    %v590 = vpop.f32.mrb[0].mxu0
    %v591 = vadd.f32 0.0, %v590
    %v592 = vpop.f32.mrb[0].mxu0
    %593 = vdwg.mxu0
    %594 = vmatprep.subr.mxu0 0.0
    %595 = vmatpush1.msra.mxu0 %v422
    %596 = vmatprep.subr.mxu0 0.0
    %597 = vmatpush1.msra.mxu0 %v427
    %598 = vmatprep.subr.mxu0 0.0
    %599 = vmatpush1.msra.mxu0 0.0
    %600 = vmatprep.subr.mxu0 0.0
    %601 = vmatpush1.msra.mxu0 0.0
    %602 = vmatprep.subr.mxu0 0.0
    %603 = vmatpush1.msra.mxu0 0.0
    %604 = vmatprep.subr.mxu0 0.0
    %605 = vmatpush1.msra.mxu0 0.0
    %606 = vmatprep.subr.mxu0 0.0
    %607 = vmatpush1.msra.mxu0 0.0
    %608 = vmatprep.subr.mxu0 0.0
    %609 = vmatpush1.msra.mxu0 0.0
    %610 = vmatprep.subr.mxu0 0.0
    %611 = vmatpush1.msra.mxu0 0.0
    %612 = vmatprep.subr.mxu0 0.0
    %613 = vmatpush1.msra.mxu0 0.0
    %614 = vmatprep.subr.mxu0 0.0
    %615 = vmatpush1.msra.mxu0 0.0
    %616 = vmatprep.subr.mxu0 0.0
    %617 = vmatpush1.msra.mxu0 0.0
    %618 = vmatprep.subr.mxu0 0.0
    %619 = vmatpush1.msra.mxu0 0.0
    %620 = vmatprep.subr.mxu0 0.0
    %621 = vmatpush1.msra.mxu0 0.0
    %622 = vmatprep.subr.mxu0 0.0
    %623 = vmatpush1.msra.mxu0 0.0
    %624 = vmatprep.subr.mxu0 0.0
    %625 = vmatpush1.msra.mxu0 0.0
    %626 = vmatprep.subr.mxu0 0.0
    %627 = vmatpush1.msra.mxu0 0.0
    %628 = vmatprep.subr.mxu0 0.0
    %629 = vmatpush1.msra.mxu0 0.0
    %630 = vmatprep.subr.mxu0 0.0
    %631 = vmatpush1.msra.mxu0 0.0
    %632 = vmatprep.subr.mxu0 0.0
    %633 = vmatpush1.msra.mxu0 0.0
    %634 = vmatprep.subr.mxu0 0.0
    %635 = vmatpush1.msra.mxu0 0.0
    %636 = vmatprep.subr.mxu0 0.0
    %637 = vmatpush1.msra.mxu0 0.0
    %638 = vmatprep.subr.mxu0 0.0
    %639 = vmatpush1.msra.mxu0 0.0
    %640 = vmatprep.subr.mxu0 0.0
    %641 = vmatpush1.msra.mxu0 0.0
    %642 = vmatprep.subr.mxu0 0.0
    %643 = vmatpush1.msra.mxu0 0.0
    %644 = vmatprep.subr.mxu0 0.0
    %645 = vmatpush1.msra.mxu0 0.0
    %646 = vmatprep.subr.mxu0 0.0
    %647 = vmatpush1.msra.mxu0 0.0
    %648 = vmatprep.subr.mxu0 0.0
    %649 = vmatpush1.msra.mxu0 0.0
    %650 = vmatprep.subr.mxu0 0.0
    %651 = vmatpush1.msra.mxu0 0.0
    %652 = vmatprep.subr.mxu0 0.0
    %653 = vmatpush1.msra.mxu0 0.0
    %654 = vmatprep.subr.mxu0 0.0
    %655 = vmatpush1.msra.mxu0 0.0
    %656 = vmatprep.subr.mxu0 0.0
    %657 = vmatpush1.msra.mxu0 0.0
    %658 = vmatprep.mubr.f32.mxu0 0.0
    %659 = vmatmul.mubr.f32.gmra.mrb[0].mxu0 %v149
    %v660 = vpop.f32.mrb[0].mxu0
    %v661 = vadd.f32 %v586, %v660
    %v662 = vpop.f32.mrb[0].mxu0
    %663 = vmatprep.mubr.f32.mxu0 0.0
    %664 = vmatmul.mubr.f32.gmra.mrb[0].mxu0 %v152
    %v665 = vpop.f32.mrb[0].mxu0
    %v666 = vadd.f32 %v591, %v665
    %v667 = vpop.f32.mrb[0].mxu0
    %668 = vdwg.mxu0
    %v669 = vld [vmem:[%s9] sm:$0x1]
    %v671 = vlaneseq
    %v672 = vshrl.u32 %v671, 7
    %v673 = vsub.s32 0, %v672
    %v674 = vrot.slane %v669, %v673
    %v676 = vadd.f32 %v661, %v674
    %v677 = vadd.f32 %v666, %v674
    %v678 = vmax.f32 %v676, 0.0
    %v679 = vmax.f32 %v677, 0.0
    %680 = vst.msk [vmem:[#allocation3] sm:$0xff] %vm147, %v678
    %681 = vst.msk [vmem:[#allocation3 + $0x8] sm:$0xff] %vm147, %v679
    %v682 = vlaneseq
    %v683 = vand.u32 %v682, 127
    %v684 = vld [vmem:[%s0] sm:$0xff]
    %685 = vset.pattern.permute.xlu0 0
    %686 = vperm.xlu0 %685, %v684
    %v687 = vpop.permute.xlu0 %686
    %vm688 = vcmp.eq.s32.totalorder %v683, %v687
    %v689 = vsel %vm688, 1, 0
    %v690 = vcvt.s32.f32 %v689
    %691 = vset.pattern.permute.xlu0 1
    %692 = vperm.xlu0 %691, %v684
    %v693 = vpop.permute.xlu0 %692
    %vm694 = vcmp.eq.s32.totalorder %v683, %v693
    %v695 = vsel %vm694, 1, 0
    %v696 = vcvt.s32.f32 %v695
    %v698 = vsel %vm147, %v690, 0
    %700 = vmatprep.subr.mxu0 0.0
    %701 = vmatpush1.msra.mxu0 %v678
    %702 = vmatprep.subr.mxu0 0.0
    %703 = vmatpush1.msra.mxu0 %v679
    %704 = vmatprep.subr.mxu0 0.0
    %705 = vmatpush1.msra.mxu0 0.0
    %706 = vmatprep.subr.mxu0 0.0
    %707 = vmatpush1.msra.mxu0 0.0
    %708 = vmatprep.subr.mxu0 0.0
    %709 = vmatpush1.msra.mxu0 0.0
    %710 = vmatprep.subr.mxu0 0.0
    %711 = vmatpush1.msra.mxu0 0.0
    %712 = vmatprep.subr.mxu0 0.0
    %713 = vmatpush1.msra.mxu0 0.0
    %714 = vmatprep.subr.mxu0 0.0
    %715 = vmatpush1.msra.mxu0 0.0
    %716 = vmatprep.subr.mxu0 0.0
    %717 = vmatpush1.msra.mxu0 0.0
    %718 = vmatprep.subr.mxu0 0.0
    %719 = vmatpush1.msra.mxu0 0.0
    %720 = vmatprep.subr.mxu0 0.0
    %721 = vmatpush1.msra.mxu0 0.0
    %722 = vmatprep.subr.mxu0 0.0
    %723 = vmatpush1.msra.mxu0 0.0
    %724 = vmatprep.subr.mxu0 0.0
    %725 = vmatpush1.msra.mxu0 0.0
    %726 = vmatprep.subr.mxu0 0.0
    %727 = vmatpush1.msra.mxu0 0.0
    %728 = vmatprep.subr.mxu0 0.0
    %729 = vmatpush1.msra.mxu0 0.0
    %730 = vmatprep.subr.mxu0 0.0
    %731 = vmatpush1.msra.mxu0 0.0
    %732 = vmatprep.subr.mxu0 0.0
    %733 = vmatpush1.msra.mxu0 0.0
    %734 = vmatprep.subr.mxu0 0.0
    %735 = vmatpush1.msra.mxu0 0.0
    %736 = vmatprep.subr.mxu0 0.0
    %737 = vmatpush1.msra.mxu0 0.0
    %738 = vmatprep.subr.mxu0 0.0
    %739 = vmatpush1.msra.mxu0 0.0
    %740 = vmatprep.subr.mxu0 0.0
    %741 = vmatpush1.msra.mxu0 0.0
    %742 = vmatprep.subr.mxu0 0.0
    %743 = vmatpush1.msra.mxu0 0.0
    %744 = vmatprep.subr.mxu0 0.0
    %745 = vmatpush1.msra.mxu0 0.0
    %746 = vmatprep.subr.mxu0 0.0
    %747 = vmatpush1.msra.mxu0 0.0
    %748 = vmatprep.subr.mxu0 0.0
    %749 = vmatpush1.msra.mxu0 0.0
    %750 = vmatprep.subr.mxu0 0.0
    %751 = vmatpush1.msra.mxu0 0.0
    %752 = vmatprep.subr.mxu0 0.0
    %753 = vmatpush1.msra.mxu0 0.0
    %754 = vmatprep.subr.mxu0 0.0
    %755 = vmatpush1.msra.mxu0 0.0
    %756 = vmatprep.subr.mxu0 0.0
    %757 = vmatpush1.msra.mxu0 0.0
    %758 = vmatprep.subr.mxu0 0.0
    %759 = vmatpush1.msra.mxu0 0.0
    %760 = vmatprep.subr.mxu0 0.0
    %761 = vmatpush1.msra.mxu0 0.0
    %762 = vmatprep.subr.mxu0 0.0
    %763 = vmatpush1.msra.mxu0 0.0
    %764 = vmatprep.mubr.f32.mxu0 0.0
    %765 = vmatmul.mubr.f32.gmra.mrb[0].mxu0 %v698
    %v766 = vpop.f32.mrb[0].mxu0
    %v767 = vadd.f32 0.0, %v766
    %v768 = vpop.f32.mrb[0].mxu0
    %769 = vdwg.mxu0
    %v771 = vsel %vm147, %v696, 0
    %773 = vmatprep.subr.mxu0 0.0
    %774 = vmatpush1.msra.mxu0 %v678
    %775 = vmatprep.subr.mxu0 0.0
    %776 = vmatpush1.msra.mxu0 %v679
    %777 = vmatprep.subr.mxu0 0.0
    %778 = vmatpush1.msra.mxu0 0.0
    %779 = vmatprep.subr.mxu0 0.0
    %780 = vmatpush1.msra.mxu0 0.0
    %781 = vmatprep.subr.mxu0 0.0
    %782 = vmatpush1.msra.mxu0 0.0
    %783 = vmatprep.subr.mxu0 0.0
    %784 = vmatpush1.msra.mxu0 0.0
    %785 = vmatprep.subr.mxu0 0.0
    %786 = vmatpush1.msra.mxu0 0.0
    %787 = vmatprep.subr.mxu0 0.0
    %788 = vmatpush1.msra.mxu0 0.0
    %789 = vmatprep.subr.mxu0 0.0
    %790 = vmatpush1.msra.mxu0 0.0
    %791 = vmatprep.subr.mxu0 0.0
    %792 = vmatpush1.msra.mxu0 0.0
    %793 = vmatprep.subr.mxu0 0.0
    %794 = vmatpush1.msra.mxu0 0.0
    %795 = vmatprep.subr.mxu0 0.0
    %796 = vmatpush1.msra.mxu0 0.0
    %797 = vmatprep.subr.mxu0 0.0
    %798 = vmatpush1.msra.mxu0 0.0
    %799 = vmatprep.subr.mxu0 0.0
    %800 = vmatpush1.msra.mxu0 0.0
    %801 = vmatprep.subr.mxu0 0.0
    %802 = vmatpush1.msra.mxu0 0.0
    %803 = vmatprep.subr.mxu0 0.0
    %804 = vmatpush1.msra.mxu0 0.0
    %805 = vmatprep.subr.mxu0 0.0
    %806 = vmatpush1.msra.mxu0 0.0
    %807 = vmatprep.subr.mxu0 0.0
    %808 = vmatpush1.msra.mxu0 0.0
    %809 = vmatprep.subr.mxu0 0.0
    %810 = vmatpush1.msra.mxu0 0.0
    %811 = vmatprep.subr.mxu0 0.0
    %812 = vmatpush1.msra.mxu0 0.0
    %813 = vmatprep.subr.mxu0 0.0
    %814 = vmatpush1.msra.mxu0 0.0
    %815 = vmatprep.subr.mxu0 0.0
    %816 = vmatpush1.msra.mxu0 0.0
    %817 = vmatprep.subr.mxu0 0.0
    %818 = vmatpush1.msra.mxu0 0.0
    %819 = vmatprep.subr.mxu0 0.0
    %820 = vmatpush1.msra.mxu0 0.0
    %821 = vmatprep.subr.mxu0 0.0
    %822 = vmatpush1.msra.mxu0 0.0
    %823 = vmatprep.subr.mxu0 0.0
    %824 = vmatpush1.msra.mxu0 0.0
    %825 = vmatprep.subr.mxu0 0.0
    %826 = vmatpush1.msra.mxu0 0.0
    %827 = vmatprep.subr.mxu0 0.0
    %828 = vmatpush1.msra.mxu0 0.0
    %829 = vmatprep.subr.mxu0 0.0
    %830 = vmatpush1.msra.mxu0 0.0
    %831 = vmatprep.subr.mxu0 0.0
    %832 = vmatpush1.msra.mxu0 0.0
    %833 = vmatprep.subr.mxu0 0.0
    %834 = vmatpush1.msra.mxu0 0.0
    %835 = vmatprep.subr.mxu0 0.0
    %836 = vmatpush1.msra.mxu0 0.0
    %837 = vmatprep.mubr.f32.mxu0 0.0
    %838 = vmatmul.mubr.f32.gmra.mrb[0].mxu0 %v771
    %v839 = vpop.f32.mrb[0].mxu0
    %v840 = vadd.f32 0.0, %v839
    %v841 = vpop.f32.mrb[0].mxu0
    %842 = vdwg.mxu0
    %844 = vrot.lane.b32.xlu0 %v840, 16
    %v845 = vpop.permute.xlu0 %844
    %v847 = vsel %vm147, %v767, %v845
    %v848 = vld [vmem:[%s10] sm:$0xff]
    %v849 = vld [vmem:[%s10 + $0x8] sm:$0xff]
    %v850 = vld [vmem:[%s10 + $0x10] sm:$0xff]
    %v851 = vld [vmem:[%s10 + $0x18] sm:$0xff]
    %v852 = vld [vmem:[%s11] sm:$0x1]
    %v854 = vlaneseq
    %v855 = vshrl.u32 %v854, 7
    %v856 = vsub.s32 0, %v855
    %v857 = vrot.slane %v852, %v856
    %v860 = vsel %vm348, %v847, 0
    %862 = vmatprep.subr.mxu0 0.0
    %863 = vmatpush1.msra.mxu0 %v848
    %864 = vmatprep.subr.mxu0 0.0
    %865 = vmatpush1.msra.mxu0 %v849
    %866 = vmatprep.subr.mxu0 0.0
    %867 = vmatpush1.msra.mxu0 %v850
    %868 = vmatprep.subr.mxu0 0.0
    %869 = vmatpush1.msra.mxu0 %v851
    %870 = vmatprep.subr.mxu0 0.0
    %871 = vmatpush1.msra.mxu0 0.0
    %872 = vmatprep.subr.mxu0 0.0
    %873 = vmatpush1.msra.mxu0 0.0
    %874 = vmatprep.subr.mxu0 0.0
    %875 = vmatpush1.msra.mxu0 0.0
    %876 = vmatprep.subr.mxu0 0.0
    %877 = vmatpush1.msra.mxu0 0.0
    %878 = vmatprep.subr.mxu0 0.0
    %879 = vmatpush1.msra.mxu0 0.0
    %880 = vmatprep.subr.mxu0 0.0
    %881 = vmatpush1.msra.mxu0 0.0
    %882 = vmatprep.subr.mxu0 0.0
    %883 = vmatpush1.msra.mxu0 0.0
    %884 = vmatprep.subr.mxu0 0.0
    %885 = vmatpush1.msra.mxu0 0.0
    %886 = vmatprep.subr.mxu0 0.0
    %887 = vmatpush1.msra.mxu0 0.0
    %888 = vmatprep.subr.mxu0 0.0
    %889 = vmatpush1.msra.mxu0 0.0
    %890 = vmatprep.subr.mxu0 0.0
    %891 = vmatpush1.msra.mxu0 0.0
    %892 = vmatprep.subr.mxu0 0.0
    %893 = vmatpush1.msra.mxu0 0.0
    %894 = vmatprep.subr.mxu0 0.0
    %895 = vmatpush1.msra.mxu0 0.0
    %896 = vmatprep.subr.mxu0 0.0
    %897 = vmatpush1.msra.mxu0 0.0
    %898 = vmatprep.subr.mxu0 0.0
    %899 = vmatpush1.msra.mxu0 0.0
    %900 = vmatprep.subr.mxu0 0.0
    %901 = vmatpush1.msra.mxu0 0.0
    %902 = vmatprep.subr.mxu0 0.0
    %903 = vmatpush1.msra.mxu0 0.0
    %904 = vmatprep.subr.mxu0 0.0
    %905 = vmatpush1.msra.mxu0 0.0
    %906 = vmatprep.subr.mxu0 0.0
    %907 = vmatpush1.msra.mxu0 0.0
    %908 = vmatprep.subr.mxu0 0.0
    %909 = vmatpush1.msra.mxu0 0.0
    %910 = vmatprep.subr.mxu0 0.0
    %911 = vmatpush1.msra.mxu0 0.0
    %912 = vmatprep.subr.mxu0 0.0
    %913 = vmatpush1.msra.mxu0 0.0
    %914 = vmatprep.subr.mxu0 0.0
    %915 = vmatpush1.msra.mxu0 0.0
    %916 = vmatprep.subr.mxu0 0.0
    %917 = vmatpush1.msra.mxu0 0.0
    %918 = vmatprep.subr.mxu0 0.0
    %919 = vmatpush1.msra.mxu0 0.0
    %920 = vmatprep.subr.mxu0 0.0
    %921 = vmatpush1.msra.mxu0 0.0
    %922 = vmatprep.subr.mxu0 0.0
    %923 = vmatpush1.msra.mxu0 0.0
    %924 = vmatprep.subr.mxu0 0.0
    %925 = vmatpush1.msra.mxu0 0.0
    %926 = vmatprep.mubr.f32.mxu0 0.0
    %927 = vmatmul.mubr.f32.gmra.mrb[0].mxu0 %v860
    %v928 = vpop.f32.mrb[0].mxu0
    %v929 = vadd.f32 %v857, %v928
    %v930 = vpop.f32.mrb[0].mxu0
    %931 = vdwg.mxu0
    %v932 = vmax.f32 %v929, 0.0
    %v933 = vld [vmem:[%s12] sm:$0xff]
    %v934 = vld [vmem:[%s12 + $0x8] sm:$0xff]
    %v935 = vld [vmem:[%s12 + $0x10] sm:$0xff]
    %v936 = vld [vmem:[%s12 + $0x18] sm:$0xff]
    %v937 = vld [vmem:[%s13] sm:$0x1]
    %v939 = vlaneseq
    %v940 = vshrl.u32 %v939, 7
    %v941 = vsub.s32 0, %v940
    %v942 = vrot.slane %v937, %v941
    %v945 = vsel %vm348, %v932, 0
    %947 = vmatprep.subr.mxu0 0.0
    %948 = vmatpush1.msra.mxu0 %v933
    %949 = vmatprep.subr.mxu0 0.0
    %950 = vmatpush1.msra.mxu0 %v934
    %951 = vmatprep.subr.mxu0 0.0
    %952 = vmatpush1.msra.mxu0 %v935
    %953 = vmatprep.subr.mxu0 0.0
    %954 = vmatpush1.msra.mxu0 %v936
    %955 = vmatprep.subr.mxu0 0.0
    %956 = vmatpush1.msra.mxu0 0.0
    %957 = vmatprep.subr.mxu0 0.0
    %958 = vmatpush1.msra.mxu0 0.0
    %959 = vmatprep.subr.mxu0 0.0
    %960 = vmatpush1.msra.mxu0 0.0
    %961 = vmatprep.subr.mxu0 0.0
    %962 = vmatpush1.msra.mxu0 0.0
    %963 = vmatprep.subr.mxu0 0.0
    %964 = vmatpush1.msra.mxu0 0.0
    %965 = vmatprep.subr.mxu0 0.0
    %966 = vmatpush1.msra.mxu0 0.0
    %967 = vmatprep.subr.mxu0 0.0
    %968 = vmatpush1.msra.mxu0 0.0
    %969 = vmatprep.subr.mxu0 0.0
    %970 = vmatpush1.msra.mxu0 0.0
    %971 = vmatprep.subr.mxu0 0.0
    %972 = vmatpush1.msra.mxu0 0.0
    %973 = vmatprep.subr.mxu0 0.0
    %974 = vmatpush1.msra.mxu0 0.0
    %975 = vmatprep.subr.mxu0 0.0
    %976 = vmatpush1.msra.mxu0 0.0
    %977 = vmatprep.subr.mxu0 0.0
    %978 = vmatpush1.msra.mxu0 0.0
    %979 = vmatprep.subr.mxu0 0.0
    %980 = vmatpush1.msra.mxu0 0.0
    %981 = vmatprep.subr.mxu0 0.0
    %982 = vmatpush1.msra.mxu0 0.0
    %983 = vmatprep.subr.mxu0 0.0
    %984 = vmatpush1.msra.mxu0 0.0
    %985 = vmatprep.subr.mxu0 0.0
    %986 = vmatpush1.msra.mxu0 0.0
    %987 = vmatprep.subr.mxu0 0.0
    %988 = vmatpush1.msra.mxu0 0.0
    %989 = vmatprep.subr.mxu0 0.0
    %990 = vmatpush1.msra.mxu0 0.0
    %991 = vmatprep.subr.mxu0 0.0
    %992 = vmatpush1.msra.mxu0 0.0
    %993 = vmatprep.subr.mxu0 0.0
    %994 = vmatpush1.msra.mxu0 0.0
    %995 = vmatprep.subr.mxu0 0.0
    %996 = vmatpush1.msra.mxu0 0.0
    %997 = vmatprep.subr.mxu0 0.0
    %998 = vmatpush1.msra.mxu0 0.0
    %999 = vmatprep.subr.mxu0 0.0
    %1000 = vmatpush1.msra.mxu0 0.0
    %1001 = vmatprep.subr.mxu0 0.0
    %1002 = vmatpush1.msra.mxu0 0.0
    %1003 = vmatprep.subr.mxu0 0.0
    %1004 = vmatpush1.msra.mxu0 0.0
    %1005 = vmatprep.subr.mxu0 0.0
    %1006 = vmatpush1.msra.mxu0 0.0
    %1007 = vmatprep.subr.mxu0 0.0
    %1008 = vmatpush1.msra.mxu0 0.0
    %1009 = vmatprep.subr.mxu0 0.0
    %1010 = vmatpush1.msra.mxu0 0.0
    %1011 = vmatprep.mubr.f32.mxu0 0.0
    %1012 = vmatmul.mubr.f32.gmra.mrb[0].mxu0 %v945
    %v1013 = vpop.f32.mrb[0].mxu0
    %v1014 = vadd.f32 %v942, %v1013
    %v1015 = vpop.f32.mrb[0].mxu0
    %1016 = vdwg.mxu0
    %v1017 = vmax.f32 %v1014, 0.0
    %v1018 = vld [vmem:[%s14] sm:$0x1]
    %v1020 = vlaneseq
    %v1021 = vshrl.u32 %v1020, 7
    %v1022 = vsub.s32 0, %v1021
    %v1023 = vrot.slane %v1018, %v1022
    %v1025 = vmul.f32 %v1017, %v1023
    %v1026 = vsel %vm147, %v1025, 0.0
    %1027 = vadd.xlane.f32.xlu0 %v1026
    %v1028 = vpop.xlane.xlu0 %1027
    %v1029 = vld [vmem:[#allocation2] sm:$0x1]
    %v1031 = vlaneseq
    %v1032 = vshrl.u32 %v1031, 7
    %v1033 = vsub.s32 0, %v1032
    %v1034 = vrot.slane %v1029, %v1033
    %v1036 = vadd.f32 %v1028, %v1034
    %v1037 = vxor.u32 %v1036, 2147483648
    %v1038 = vmul.f32 %v1037, 1.442695
    %v1039 = vpow.pop %v1038
    %v1040 = vadd.f32 %v1039, 1.0
    %v1041 = vrcp.pop %v1040
    %v1042 = vmul.f32 1.0, %v1041
    %1044 = vset.pattern.permute.xlu0 0
    %1045 = vperm.xlu0 %1044, %v1042
    %v1046 = vpop.permute.xlu0 %1045
    %v1048 = vsel %vm147, %v1017, %v1046
    %1049 = vst [vmem:[%s17] sm:$0xff] %v1048
    // Predicated region
    $region66: #{gcnmk_forward.1} parent=1 // pred_check
      _
    $region67: #{gcnmk_forward.1} parent=1 // pred_check_branch
      %1051 = sbr.rel (0) target = $region69
    $region68: #{gcnmk_forward.1} parent=1 // pred_region
      %s1053 = ssub.s32 256, 256
      %1054 = vsyncadd [#allocation4], %s1053
      %s1055 = sshll.u32 [#allocation3], 4
      %s1056 = int_to_ptr.vmem [resolvable:$true] %s1055
      %1061 = dma.vmem_to_hbm [thread:$0]  %s1056, 256, %s16, [#allocation4], 128, 128, 8
    $region69: #{gcnmk_forward.1} parent=1 // pred_fallthru
      _
    // Predicated region
    $region70: #{gcnmk_forward.1} parent=1 // pred_check
      _
    $region71: #{gcnmk_forward.1} parent=1 // pred_check_branch
      %1063 = sbr.rel (0) target = $region73
    $region72: #{gcnmk_forward.1} parent=1 // pred_region
      _
    $region73: #{gcnmk_forward.1} parent=1 // pred_fallthru
      _
    // Predicated region
    $region74: #{gcnmk_forward.1} parent=1 // pred_check
      _
    $region75: #{gcnmk_forward.1} parent=1 // pred_check_branch
      %1065 = sbr.rel (0) target = $region77
    $region76: #{gcnmk_forward.1} parent=1 // pred_region
      %1066 = dma.done [#allocation4], 256
    $region77: #{gcnmk_forward.1} parent=1 // pred_fallthru
      _
    // Predicated region
    $region78: #{gcnmk_forward.1} parent=1 // pred_check
      _
    $region79: #{gcnmk_forward.1} parent=1 // pred_check_branch
      %1068 = sbr.rel (0) target = $region81
    $region80: #{gcnmk_forward.1} parent=1 // pred_region
      _
    $region81: #{gcnmk_forward.1} parent=1 // pred_fallthru
      _
    %1069 = vsyncpa [#allocation4], 1

</llo_original>
